<compile_context>
chip_gen: v7x
topology: tpu7x:2x2x1
jax: 0.10.0
libtpu: 0.0.40
codegen_flags: <defaults>
</compile_context>

<pallas_src>
import jax
import jax.numpy as jnp
import numpy as np
from jax import lax
from jax.experimental import pallas as pl
from jax.experimental.pallas import tpu as pltpu


def _round_up(v, m):
    return (v + m - 1) // m * m


# ---------------------------------------------------------------------------
# Fused kernel: per-tap conv1 matmul (+BN shift, ReLU) -> 9-tap running max
# (maxpool restricted to consumed positions) -> composed 64->512 affine.
# ---------------------------------------------------------------------------
def _fused_kernel(patch_ref, w1_ref, s1_ref, w2_ref, s2_ref, o_ref, pool_ref):
    t = pl.program_id(1)

    # conv1 tap: (tw,147)bf16 @ (147,128)bf16 -> f32 accum, + folded-BN shift, ReLU.
    acc = jnp.dot(patch_ref[...], w1_ref[...], preferred_element_type=jnp.float32)
    act = jnp.maximum(acc + s1_ref[...], 0.0)

    # 3x3 maxpool over the 9 taps as a running max.  Init with 0 is valid ONLY because
    # act is post-ReLU (>= 0); border taps are clamped/duplicated patches (same max as
    # the maxpool's -inf padding).
    @pl.when(t == 0)
    def _():
        pool_ref[...] = jnp.zeros_like(pool_ref)

    pool_ref[...] = jnp.maximum(pool_ref[...], act)

    # Last tap: apply the pre-composed eight [1x1 conv + BN] blocks (64->512 affine;
    # padded channels 64..127 are exactly zero) and write the lane-dense output tile.
    @pl.when(t == pl.num_programs(1) - 1)
    def _():
        pooled = pool_ref[...].astype(jnp.bfloat16)
        y = jnp.dot(pooled, w2_ref[...], preferred_element_type=jnp.float32)
        o_ref[...] = (y + s2_ref[...]).astype(o_ref.dtype)


def fused_pool_fc(patches, w1, s1, w2, s2, *, tw):
    """patches: (9, Nw_pad, 147) bf16 -> (Nw_pad, 512) f32."""
    n_tap, nw_pad, K = patches.shape
    Cmid = w1.shape[1]
    Cout = w2.shape[1]
    grid = (nw_pad // tw, n_tap)
    return pl.pallas_call(
        _fused_kernel,
        out_shape=jax.ShapeDtypeStruct((nw_pad, Cout), jnp.float32),
        grid=grid,
        in_specs=[
            pl.BlockSpec((None, tw, K), lambda w, t: (t, w, 0)),   # one tap slab per step
            pl.BlockSpec((K, Cmid), lambda w, t: (0, 0)),
            pl.BlockSpec((1, Cmid), lambda w, t: (0, 0)),
            pl.BlockSpec((Cmid, Cout), lambda w, t: (0, 0)),
            pl.BlockSpec((1, Cout), lambda w, t: (0, 0)),
        ],
        out_specs=pl.BlockSpec((tw, Cout), lambda w, t: (w, 0)),
        scratch_shapes=[pltpu.VMEM((tw, Cmid), jnp.float32)],
        compiler_params=pltpu.CompilerParams(
            dimension_semantics=("parallel", "arbitrary")),
    )(patches, w1, s1, w2, s2)


# ---------------------------------------------------------------------------
# Deterministic synthetic parameters + offline BN folding / chain composition.
# ---------------------------------------------------------------------------
def _fold_conv_bn(key, cin, cout, k):
    """Conv2d + BatchNorm2d (inference stats) folded: y = conv(x, w_scaled) + shift."""
    k1, k2, k3, k4, k5, k6 = jax.random.split(key, 6)
    fan_in = cin * k * k
    w = jax.random.normal(k1, (cout, cin, k, k), jnp.float32) / np.sqrt(fan_in)
    b = 0.01 * jax.random.normal(k2, (cout,), jnp.float32)
    gamma = 1.0 + 0.1 * jax.random.normal(k3, (cout,), jnp.float32)
    beta = 0.1 * jax.random.normal(k4, (cout,), jnp.float32)
    mean = 0.1 * jax.random.normal(k5, (cout,), jnp.float32)
    var = 1.0 + 0.1 * jax.random.uniform(k6, (cout,), jnp.float32)
    scale = gamma / jnp.sqrt(var + 1e-5)
    shift = (b - mean) * scale + beta
    w_scaled = w * scale[:, None, None, None]
    return w_scaled, shift


def init_params(key, layers=(2, 2, 2, 2)):
    keys = jax.random.split(key, 1 + sum(layers))
    ki = iter(keys)

    # conv1: weight stored as a (ky,kx,cin)=147 x Cout matrix.  K stays 147 (unpadded);
    # Cout padded 64->128 lane-dense (padded channels have zero weight AND zero shift,
    # so post-ReLU they are exactly 0 and contribute nothing downstream).
    w1, s1 = _fold_conv_bn(next(ki), 3, 64, 7)
    w1_mat = jnp.transpose(w1, (2, 3, 1, 0)).reshape(7 * 7 * 3, 64)
    Cp = 128
    conv1_w = jnp.zeros((7 * 7 * 3, Cp), jnp.float32).at[:, :64].set(w1_mat)
    conv1_shift = jnp.zeros((1, Cp), jnp.float32).at[:, :64].set(s1[None, :])

    # branch=0: compose all eight [1x1 conv (stride) + BN] blocks into one affine map.
    # The reference _make_layer applies `stride` to EVERY block, so the composed spatial
    # stride is the product over all 8 blocks (= 64 for layers=[2,2,2,2]).
    inplanes = 64
    layer_specs = [(64, layers[0], 1), (128, layers[1], 2),
                   (256, layers[2], 2), (512, layers[3], 2)]
    w_comb = jnp.eye(inplanes, dtype=jnp.float32)
    shift_comb = jnp.zeros((inplanes,), jnp.float32)
    layer_stride = 1
    ref_blocks = []
    for planes, blocks, stride in layer_specs:
        for _ in range(blocks):
            wb, sb = _fold_conv_bn(next(ki), inplanes, planes, 1)
            wb2 = wb.reshape(planes, inplanes).T               # (inplanes, planes)
            ref_blocks.append((wb2, sb, stride))
            w_comb = w_comb @ wb2
            shift_comb = shift_comb @ wb2 + sb
            layer_stride *= stride
            inplanes = planes
    fc_w = jnp.zeros((Cp, inplanes), jnp.float32).at[:64, :].set(w_comb)
    fc_shift = shift_comb[None, :]

    params = {
        "conv1_w": conv1_w.astype(jnp.bfloat16),
        "conv1_shift": conv1_shift,
        "fc_w": fc_w.astype(jnp.bfloat16),
        "fc_shift": fc_shift,
        "layer_stride": layer_stride,          # static python int
    }
    ref = {"w1": w1, "s1": s1, "blocks": ref_blocks}
    return params, ref


# ---------------------------------------------------------------------------
# Forward pass (NCHW in / NCHW out, like the PyTorch module).
# ---------------------------------------------------------------------------
def resnet_feat_forward(x_nchw, params, *, max_tw=512):
    N, Cin, H, W = x_nchw.shape
    ps = 2 * params["layer_stride"]            # conv1-grid stride consumed by maxpool+chain
    Hc = (H - 1) // 2 + 1                      # conv1 (k7,s2,p3) output size
    Wc = (W - 1) // 2 + 1
    hp = (Hc - 1) // ps + 1                    # final spatial size
    wp = (Wc - 1) // ps + 1

    x = jnp.transpose(x_nchw, (0, 2, 3, 1)).astype(jnp.bfloat16)   # NHWC bf16 operands
    xp = jnp.pad(x, ((0, 0), (3, 3), (3, 3), (0, 0)))              # conv1 zero padding

    # conv1 positions actually consumed: the 3x3 maxpool window around (ps*i, ps*j).
    # Border clamping duplicates an in-range tap -> max unchanged (== -inf pooling pad).
    # All indices are static numpy, so this is a small static gather of ~0.1-4% of input.
    taps = np.array([-1, 0, 1])
    r_c1 = np.clip(ps * np.arange(hp)[:, None] + taps[None, :], 0, Hc - 1)   # (hp,3)
    c_c1 = np.clip(ps * np.arange(wp)[:, None] + taps[None, :], 0, Wc - 1)   # (wp,3)
    rows = ((2 * r_c1)[:, :, None] + np.arange(7)).reshape(-1)               # (hp*3*7,)
    cols = ((2 * c_c1)[:, :, None] + np.arange(7)).reshape(-1)               # (wp*3*7,)
    g = jnp.take(xp, jnp.asarray(rows), axis=1)
    g = jnp.take(g, jnp.asarray(cols), axis=2)                     # (N, hp*21, wp*21, Cin)
    g = g.reshape(N, hp, 3, 7, wp, 3, 7, Cin)
    g = jnp.transpose(g, (2, 5, 0, 1, 4, 3, 6, 7))                 # (3,3, N,hp,wp, 7,7,Cin)
    patches = g.reshape(9, N * hp * wp, 7 * 7 * Cin)               # (9, Nw, 147)

    nw = N * hp * wp
    nw_pad = _round_up(nw, 16)                 # bf16 packs 16 rows per sublane group
    tw = nw_pad if nw_pad <= max_tw else max_tw
    if nw_pad % tw:
        nw_pad = _round_up(nw_pad, tw)
    if nw_pad != nw:
        patches = jnp.pad(patches, ((0, 0), (0, nw_pad - nw), (0, 0)))

    out = fused_pool_fc(patches, params["conv1_w"], params["conv1_shift"],
                        params["fc_w"], params["fc_shift"], tw=tw)
    out = out[:nw].reshape(N, hp, wp, -1)
    return jnp.transpose(out, (0, 3, 1, 2))                        # NCHW f32


# ---------------------------------------------------------------------------
# Pure-JAX reference of the module's branch=0 inference path (unfused, full maps).
# ---------------------------------------------------------------------------
def reference_forward(x_nchw, ref):
    xb = x_nchw.astype(jnp.bfloat16).astype(jnp.float32)           # match kernel operand dtype
    wb = ref["w1"].astype(jnp.bfloat16).astype(jnp.float32)
    y = lax.conv_general_dilated(xb, wb, window_strides=(2, 2),
                                 padding=((3, 3), (3, 3)),
                                 dimension_numbers=("NCHW", "OIHW", "NCHW"))
    y = jnp.maximum(y + ref["s1"][None, :, None, None], 0.0)
    y = lax.reduce_window(y, -jnp.inf, lax.max, (1, 1, 3, 3), (1, 1, 2, 2),
                          ((0, 0), (0, 0), (1, 1), (1, 1)))
    for wb_i, sb_i, st in ref["blocks"]:                           # 1x1 conv (stride) + BN
        y = y[:, :, ::st, ::st]
        y = jnp.einsum("nchw,cd->ndhw", y, wb_i) + sb_i[None, :, None, None]
    return y


if __name__ == "__main__":
    key = jax.random.PRNGKey(0)
    kx, kp = jax.random.split(key)
    params, ref = init_params(kp, layers=(2, 2, 2, 2))

    fwd = jax.jit(lambda inp: resnet_feat_forward(inp, params))
    ref_fwd = jax.jit(lambda inp: reference_forward(inp, ref))

    # Small case (1x1 output) + a case exercising multiple pooled windows (2x2 output).
    for shape in [(2, 3, 32, 32), (1, 3, 260, 260)]:
        x = jax.random.normal(jax.random.fold_in(kx, shape[-1]), shape, jnp.float32)
        out = jax.block_until_ready(fwd(x))
        expect = jax.block_until_ready(ref_fwd(x))
        assert out.shape == expect.shape, (out.shape, expect.shape)
        assert bool(jnp.all(jnp.isfinite(out)))
        err = float(jnp.max(jnp.abs(out - expect)))
        scale = float(jnp.max(jnp.abs(expect))) + 1.0
        assert err <= 0.1 * scale, (err, scale)

    print("KERNEL_OK")
</pallas_src>

<mosaic_0001>
module attributes {stable_mosaic.version = 11 : i64} {
  func.func @_fused_kernel(%arg0: i32, %arg1: i32, %arg2: memref<1x16x147xbf16, #tpu.memory_space<vmem>>, %arg3: memref<147x128xbf16, #tpu.memory_space<vmem>>, %arg4: memref<1x128xf32, #tpu.memory_space<vmem>>, %arg5: memref<128x512xbf16, #tpu.memory_space<vmem>>, %arg6: memref<1x512xf32, #tpu.memory_space<vmem>>, %arg7: memref<16x512xf32, #tpu.memory_space<vmem>>, %arg8: memref<16x128xf32, #tpu.memory_space<vmem>>) attributes {dimension_semantics = [#tpu.dimension_semantics<parallel>, #tpu.dimension_semantics<arbitrary>], iteration_bounds = array<i64: 1, 9>, scalar_prefetch = 0 : i64, scratch_operands = 1 : i64, tpu.core_type = #tpu.core_type<tc>, window_params = [{transform_indices = @transform_0, window_bounds = array<i64: 1, 16, 147>}, {pipeline_mode = #tpu.pipeline_mode<synchronous>, transform_indices = @transform_1, window_bounds = array<i64: 147, 128>}, {pipeline_mode = #tpu.pipeline_mode<synchronous>, transform_indices = @transform_2, window_bounds = array<i64: 1, 128>}, {pipeline_mode = #tpu.pipeline_mode<synchronous>, transform_indices = @transform_3, window_bounds = array<i64: 128, 512>}, {pipeline_mode = #tpu.pipeline_mode<synchronous>, transform_indices = @transform_4, window_bounds = array<i64: 1, 512>}, {transform_indices = @transform_5, window_bounds = array<i64: 16, 512>}]} {
    %c0 = arith.constant 0 : index
    %c0_0 = arith.constant 0 : index
    %c0_1 = arith.constant 0 : index
    %0 = vector.load %arg2[%c0, %c0_0, %c0_1] : memref<1x16x147xbf16, #tpu.memory_space<vmem>>, vector<1x16x147xbf16>
    %1 = vector.shape_cast %0 : vector<1x16x147xbf16> to vector<16x147xbf16>
    %c0_2 = arith.constant 0 : index
    %c0_3 = arith.constant 0 : index
    %2 = vector.load %arg3[%c0_2, %c0_3] : memref<147x128xbf16, #tpu.memory_space<vmem>>, vector<147x128xbf16>
    %cst = arith.constant dense<0.000000e+00> : vector<16x128xf32>
    %3 = tpu.matmul %1, %2, %cst {dimension_numbers = #tpu.dot_dimension_numbers<[1], [0], [0], [1], [0, 0, 1, 1], [], []>} : vector<16x147xbf16>, vector<147x128xbf16>, vector<16x128xf32> -> vector<16x128xf32>
    %c0_4 = arith.constant 0 : index
    %c0_5 = arith.constant 0 : index
    %4 = vector.load %arg4[%c0_4, %c0_5] : memref<1x128xf32, #tpu.memory_space<vmem>>, vector<1x128xf32>
    %5 = vector.broadcast %4 : vector<1x128xf32> to vector<16x128xf32>
    %6 = arith.addf %3, %5 : vector<16x128xf32>
    %cst_6 = arith.constant 0.000000e+00 : f32
    %7 = vector.broadcast %cst_6 : f32 to vector<16x128xf32>
    %8 = arith.maximumf %6, %7 : vector<16x128xf32>
    %c0_i32 = arith.constant 0 : i32
    %9 = arith.cmpi eq, %arg1, %c0_i32 : i32
    %10 = arith.extui %9 : i1 to i32
    %c0_i32_7 = arith.constant 0 : i32
    %11 = arith.cmpi ne, %10, %c0_i32_7 : i32
    scf.if %11 {
      %cst_13 = arith.constant 0.000000e+00 : f32
      %18 = vector.broadcast %cst_13 : f32 to vector<16x128xf32>
      %c0_14 = arith.constant 0 : index
      %c0_15 = arith.constant 0 : index
      %19 = vector.load %arg8[%c0_14, %c0_15] : memref<16x128xf32, #tpu.memory_space<vmem>>, vector<16x128xf32>
      tpu.vector_store %arg8[%c0_14, %c0_15], %18 {strides = array<i32>} : memref<16x128xf32, #tpu.memory_space<vmem>>, vector<16x128xf32>,
    } else {
    }
    %c0_8 = arith.constant 0 : index
    %c0_9 = arith.constant 0 : index
    %12 = vector.load %arg8[%c0_8, %c0_9] : memref<16x128xf32, #tpu.memory_space<vmem>>, vector<16x128xf32>
    %13 = arith.maximumf %12, %8 : vector<16x128xf32>
    %c0_10 = arith.constant 0 : index
    %c0_11 = arith.constant 0 : index
    %14 = vector.load %arg8[%c0_10, %c0_11] : memref<16x128xf32, #tpu.memory_space<vmem>>, vector<16x128xf32>
    tpu.vector_store %arg8[%c0_10, %c0_11], %13 {strides = array<i32>} : memref<16x128xf32, #tpu.memory_space<vmem>>, vector<16x128xf32>,
    %c8_i32 = arith.constant 8 : i32
    %15 = arith.cmpi eq, %arg1, %c8_i32 : i32
    %16 = arith.extui %15 : i1 to i32
    %c0_i32_12 = arith.constant 0 : i32
    %17 = arith.cmpi ne, %16, %c0_i32_12 : i32
    scf.if %17 {
      %c0_13 = arith.constant 0 : index
      %c0_14 = arith.constant 0 : index
      %18 = vector.load %arg8[%c0_13, %c0_14] : memref<16x128xf32, #tpu.memory_space<vmem>>, vector<16x128xf32>
      %19 = arith.truncf %18 : vector<16x128xf32> to vector<16x128xbf16>
      %c0_15 = arith.constant 0 : index
      %c0_16 = arith.constant 0 : index
      %20 = vector.load %arg5[%c0_15, %c0_16] : memref<128x512xbf16, #tpu.memory_space<vmem>>, vector<128x512xbf16>
      %cst_17 = arith.constant dense<0.000000e+00> : vector<16x512xf32>
      %21 = tpu.matmul %19, %20, %cst_17 {dimension_numbers = #tpu.dot_dimension_numbers<[1], [0], [0], [1], [0, 0, 1, 1], [], []>} : vector<16x128xbf16>, vector<128x512xbf16>, vector<16x512xf32> -> vector<16x512xf32>
      %c0_18 = arith.constant 0 : index
      %c0_19 = arith.constant 0 : index
      %22 = vector.load %arg6[%c0_18, %c0_19] : memref<1x512xf32, #tpu.memory_space<vmem>>, vector<1x512xf32>
      %23 = vector.broadcast %22 : vector<1x512xf32> to vector<16x512xf32>
      %24 = arith.addf %21, %23 : vector<16x512xf32>
      %c0_20 = arith.constant 0 : index
      %c0_21 = arith.constant 0 : index
      %25 = vector.load %arg7[%c0_20, %c0_21] : memref<16x512xf32, #tpu.memory_space<vmem>>, vector<16x512xf32>
      tpu.vector_store %arg7[%c0_20, %c0_21], %24 {strides = array<i32>} : memref<16x512xf32, #tpu.memory_space<vmem>>, vector<16x512xf32>,
    } else {
    }
    return
  }
  func.func @transform_0(%arg0: i32, %arg1: i32) -> (i32, i32, i32) {
    %c0_i32 = arith.constant 0 : i32
    %c0_i32_0 = arith.constant 0 : i32
    return %arg1, %arg0, %c0_i32 : i32, i32, i32
  }
  func.func @transform_1(%arg0: i32, %arg1: i32) -> (i32, i32) {
    %c0_i32 = arith.constant 0 : i32
    %c0_i32_0 = arith.constant 0 : i32
    %c0_i32_1 = arith.constant 0 : i32
    return %c0_i32, %c0_i32_0 : i32, i32
  }
  func.func @transform_2(%arg0: i32, %arg1: i32) -> (i32, i32) {
    %c0_i32 = arith.constant 0 : i32
    %c0_i32_0 = arith.constant 0 : i32
    %c0_i32_1 = arith.constant 0 : i32
    return %c0_i32, %c0_i32_0 : i32, i32
  }
  func.func @transform_3(%arg0: i32, %arg1: i32) -> (i32, i32) {
    %c0_i32 = arith.constant 0 : i32
    %c0_i32_0 = arith.constant 0 : i32
    %c0_i32_1 = arith.constant 0 : i32
    return %c0_i32, %c0_i32_0 : i32, i32
  }
  func.func @transform_4(%arg0: i32, %arg1: i32) -> (i32, i32) {
    %c0_i32 = arith.constant 0 : i32
    %c0_i32_0 = arith.constant 0 : i32
    %c0_i32_1 = arith.constant 0 : i32
    return %c0_i32, %c0_i32_0 : i32, i32
  }
  func.func @transform_5(%arg0: i32, %arg1: i32) -> (i32, i32) {
    %c0_i32 = arith.constant 0 : i32
    %c0_i32_0 = arith.constant 0 : i32
    return %arg0, %c0_i32 : i32, i32
  }
}

</mosaic_0001>

<llo_original>
// kernel: _lambda_.1
$region0: #{_lambda_.1}
  #allocation0 [shape = 'u32[]', space=smem, size = 0x4, offset = 0x4, fixed_abs, tag = 'smem constant byte address 0x4 - core index']
  #allocation1 [shape = 'u32[144,128]{1,0:T(1,128)}', space=vmem, size = 0x12000, scoped, tag = 'internal scratch']
  #allocation2 [shape = 'f32[16,128]{1,0:T(8,128)}', space=vmem, size = 0x2000, scoped, tag = 'scratch operand']
  %s0 = inlined_call_operand.vmem [shape: bf16[9,16,147], index: 0, kind: input, shape index: {}]
  %s1 = inlined_call_operand.vmem [shape: bf16[147,128], index: 1, kind: input, shape index: {}]
  %s2 = inlined_call_operand.vmem [shape: f32[1,128], index: 2, kind: input, shape index: {}]
  %s3 = inlined_call_operand.vmem [shape: bf16[128,512], index: 3, kind: input, shape index: {}]
  %s4 = inlined_call_operand.vmem [shape: f32[1,512], index: 4, kind: input, shape index: {}]
  %s5 = inlined_call_operand.vmem [shape: f32[16,512], index: 5, kind: output, shape index: {}]
  %s6 = sld [smem:[#allocation0]]
  $region61: #{_lambda_.1} parent=0
    _
  %s8 = ssub.s32 1, %s6
  %s9 = scalar_select 0, %s8, %s6
  loop: start=0, step=1, limit=11
  $region2: #{_lambda_.1} parent=0 // loop_pre_header
    _
  $region3: #{_lambda_.1} parent=0 // loop_header
    %s11 = sphi 0, %s15
    %p12 = scmp.ge.s32.totalorder %s11, 11
    %s18 = sphi 0, %s30
    %s19 = sphi 0, %s26
    %s20 = sphi 0, %s18
    %s21 = sphi 0, %s19
    %s22 = sphi 0, %s20
    %s23 = sphi 0, %s21
    %s35 = sphi 0, %s37
    %s38 = sphi 0, %s35
    %s39 = sphi 0, %s38
    %s55 = sphi 0, %s39
    %s59 = sphi 0, %s59
    %s61 = sphi 0, %s59
    %s62 = sphi 0, %s61
    %s76 = sphi 0, %s62
    %s80 = sphi 0, %s80
    %s82 = sphi 0, %s80
    %s83 = sphi 0, %s82
    %s97 = sphi 0, %s83
    %s101 = sphi 0, %s101
    %s103 = sphi 0, %s101
    %s104 = sphi 0, %s103
    %s118 = sphi 0, %s104
    %s122 = sphi 0, %s122
    %s124 = sphi 0, %s122
    %s125 = sphi 0, %s124
    %s139 = sphi 0, %s125
    %s145 = sphi 0, %s147
    %s148 = sphi 0, %s145
    %s149 = sphi 0, %s148
    %s165 = sphi 0, %s149
  $region4: #{_lambda_.1} parent=0 // loop_header_branch
    %14 = sbr.rel (%p12) target = $region8
  $region5: #{_lambda_.1} parent=0 // loop_body
    %s16 = ssub.s32 %s11, 1
    %s17 = ssub.s32 %s11, 2
    %s24 = sadd.s32 1, %s19
    %p25 = scmp.ge.s32.totalorder %s24, 9
    %s26 = scalar_select %p25, 0, %s24
    %s27 = sadd.s32 1, %s18
    %s28 = scalar_select %p25, %s27, %s18
    %p29 = scmp.ge.s32.totalorder %s28, 1
    %s30 = scalar_select %p29, 0, %s28
    %s31 = ssub.s32 %s19, %s26
    %s32 = ssub.s32 %s18, %s30
    %s33 = sor.u32 %s31, %s32
    %p34 = scmp.eq.s32.totalorder %s33, 0
    %s36 = sadd.s32 %s35, 1
    %s37 = scalar_select %p34, %s35, %s36
    %p40 = pneg %p34
    %p41 = scmp.eq.s32.totalorder %s11, 8
    %p42 = por %p40, %p41
    %p43 = scmp.ne.s32.totalorder %s35, %s38
    %p44 = scmp.eq.s32.totalorder %s11, 0
    %p45 = por %p43, %p44
    %p46 = scmp.ne.s32.totalorder %s35, %s38
    %p47 = scmp.eq.s32.totalorder %s16, 8
    %p48 = por %p46, %p47
    %p49 = scmp.ne.s32.totalorder %s38, %s39
    %p50 = scmp.eq.s32.totalorder %s16, 0
    %p51 = por %p49, %p50
    %p52 = scmp.ne.s32.totalorder %s38, %s39
    %p53 = scmp.eq.s32.totalorder %s17, 8
    %p54 = por %p52, %p53
    %p56 = scmp.ne.s32.totalorder %s39, %s55
    %p57 = scmp.eq.s32.totalorder %s17, 0
    %p58 = por %p56, %p57
    %s60 = sadd.s32 %s59, 1
    %p63 = scmp.eq.s32.totalorder %s11, 8
    %p64 = scmp.ne.s32.totalorder %s59, %s61
    %p65 = scmp.eq.s32.totalorder %s11, 0
    %p66 = por %p64, %p65
    %p67 = scmp.ne.s32.totalorder %s59, %s61
    %p68 = scmp.eq.s32.totalorder %s16, 8
    %p69 = por %p67, %p68
    %p70 = scmp.ne.s32.totalorder %s61, %s62
    %p71 = scmp.eq.s32.totalorder %s16, 0
    %p72 = por %p70, %p71
    %p73 = scmp.ne.s32.totalorder %s61, %s62
    %p74 = scmp.eq.s32.totalorder %s17, 8
    %p75 = por %p73, %p74
    %p77 = scmp.ne.s32.totalorder %s62, %s76
    %p78 = scmp.eq.s32.totalorder %s17, 0
    %p79 = por %p77, %p78
    %s81 = sadd.s32 %s80, 1
    %p84 = scmp.eq.s32.totalorder %s11, 8
    %p85 = scmp.ne.s32.totalorder %s80, %s82
    %p86 = scmp.eq.s32.totalorder %s11, 0
    %p87 = por %p85, %p86
    %p88 = scmp.ne.s32.totalorder %s80, %s82
    %p89 = scmp.eq.s32.totalorder %s16, 8
    %p90 = por %p88, %p89
    %p91 = scmp.ne.s32.totalorder %s82, %s83
    %p92 = scmp.eq.s32.totalorder %s16, 0
    %p93 = por %p91, %p92
    %p94 = scmp.ne.s32.totalorder %s82, %s83
    %p95 = scmp.eq.s32.totalorder %s17, 8
    %p96 = por %p94, %p95
    %p98 = scmp.ne.s32.totalorder %s83, %s97
    %p99 = scmp.eq.s32.totalorder %s17, 0
    %p100 = por %p98, %p99
    %s102 = sadd.s32 %s101, 1
    %p105 = scmp.eq.s32.totalorder %s11, 8
    %p106 = scmp.ne.s32.totalorder %s101, %s103
    %p107 = scmp.eq.s32.totalorder %s11, 0
    %p108 = por %p106, %p107
    %p109 = scmp.ne.s32.totalorder %s101, %s103
    %p110 = scmp.eq.s32.totalorder %s16, 8
    %p111 = por %p109, %p110
    %p112 = scmp.ne.s32.totalorder %s103, %s104
    %p113 = scmp.eq.s32.totalorder %s16, 0
    %p114 = por %p112, %p113
    %p115 = scmp.ne.s32.totalorder %s103, %s104
    %p116 = scmp.eq.s32.totalorder %s17, 8
    %p117 = por %p115, %p116
    %p119 = scmp.ne.s32.totalorder %s104, %s118
    %p120 = scmp.eq.s32.totalorder %s17, 0
    %p121 = por %p119, %p120
    %s123 = sadd.s32 %s122, 1
    %p126 = scmp.eq.s32.totalorder %s11, 8
    %p127 = scmp.ne.s32.totalorder %s122, %s124
    %p128 = scmp.eq.s32.totalorder %s11, 0
    %p129 = por %p127, %p128
    %p130 = scmp.ne.s32.totalorder %s122, %s124
    %p131 = scmp.eq.s32.totalorder %s16, 8
    %p132 = por %p130, %p131
    %p133 = scmp.ne.s32.totalorder %s124, %s125
    %p134 = scmp.eq.s32.totalorder %s16, 0
    %p135 = por %p133, %p134
    %p136 = scmp.ne.s32.totalorder %s124, %s125
    %p137 = scmp.eq.s32.totalorder %s17, 8
    %p138 = por %p136, %p137
    %p140 = scmp.ne.s32.totalorder %s125, %s139
    %p141 = scmp.eq.s32.totalorder %s17, 0
    %p142 = por %p140, %p141
    %s143 = ssub.s32 %s18, %s30
    %p144 = scmp.eq.s32.totalorder %s143, 0
    %s146 = sadd.s32 %s145, 1
    %s147 = scalar_select %p144, %s145, %s146
    %p150 = pneg %p144
    %p151 = scmp.eq.s32.totalorder %s11, 8
    %p152 = por %p150, %p151
    %p153 = scmp.ne.s32.totalorder %s145, %s148
    %p154 = scmp.eq.s32.totalorder %s11, 0
    %p155 = por %p153, %p154
    %p156 = scmp.ne.s32.totalorder %s145, %s148
    %p157 = scmp.eq.s32.totalorder %s16, 8
    %p158 = por %p156, %p157
    %p159 = scmp.ne.s32.totalorder %s148, %s149
    %p160 = scmp.eq.s32.totalorder %s16, 0
    %p161 = por %p159, %p160
    %p162 = scmp.ne.s32.totalorder %s148, %s149
    %p163 = scmp.eq.s32.totalorder %s17, 8
    %p164 = por %p162, %p163
    %p166 = scmp.ne.s32.totalorder %s149, %s165
    %p167 = scmp.eq.s32.totalorder %s17, 0
    %p168 = por %p166, %p167
    %p169 = scmp.le.s32.totalorder 1, %s11
    %p170 = scmp.lt.s32.totalorder %s11, 10
    %p171 = pnand %p169, %p170
    %p172 = pneg %p171
    // Predicated region
    $region9: #{_lambda_.1} parent=5 // pred_check
      _
    $region10: #{_lambda_.1} parent=5 // pred_check_branch
      %174 = sbr.rel (%p171) target = $region12
    $region11: #{_lambda_.1} parent=5 // pred_region
      %s175 = ssub.s32 %s11, 1
      // Predicated region
      $region13: #{_lambda_.1} parent=11 // pred_check
        %p176 = pneg %p72
      $region14: #{_lambda_.1} parent=11 // pred_check_branch
        %178 = sbr.rel (%p176) target = $region16
      $region15: #{_lambda_.1} parent=11 // pred_region
        _
      $region16: #{_lambda_.1} parent=11 // pred_fallthru
        _
      // Predicated region
      $region17: #{_lambda_.1} parent=11 // pred_check
        %p179 = pneg %p93
      $region18: #{_lambda_.1} parent=11 // pred_check_branch
        %181 = sbr.rel (%p179) target = $region20
      $region19: #{_lambda_.1} parent=11 // pred_region
        _
      $region20: #{_lambda_.1} parent=11 // pred_fallthru
        _
      // Predicated region
      $region21: #{_lambda_.1} parent=11 // pred_check
        %p182 = pneg %p114
      $region22: #{_lambda_.1} parent=11 // pred_check_branch
        %184 = sbr.rel (%p182) target = $region24
      $region23: #{_lambda_.1} parent=11 // pred_region
        _
      $region24: #{_lambda_.1} parent=11 // pred_fallthru
        _
      // Predicated region
      $region25: #{_lambda_.1} parent=11 // pred_check
        %p185 = pneg %p135
      $region26: #{_lambda_.1} parent=11 // pred_check_branch
        %187 = sbr.rel (%p185) target = $region28
      $region27: #{_lambda_.1} parent=11 // pred_region
        _
      $region28: #{_lambda_.1} parent=11 // pred_fallthru
        _
    $region12: #{_lambda_.1} parent=5 // pred_fallthru
      _
    %p188 = scmp.lt.s32.totalorder %s11, 9
    // Predicated region
    $region29: #{_lambda_.1} parent=5 // pred_check
      %p189 = pneg %p188
    $region30: #{_lambda_.1} parent=5 // pred_check_branch
      %191 = sbr.rel (%p189) target = $region32
    $region31: #{_lambda_.1} parent=5 // pred_region
      // Predicated region
      $region33: #{_lambda_.1} parent=31 // pred_check
        %p192 = pneg %p45
      $region34: #{_lambda_.1} parent=31 // pred_check_branch
        %194 = sbr.rel (%p192) target = $region36
      $region35: #{_lambda_.1} parent=31 // pred_region
        %s195 = smul.u32 2, %s18
        %p196 = scmp.lt.s32.totalorder %s19, 8
        %s197 = scalar_select %p196, %s19, 8
        %p198 = scmp.lt.s32.totalorder %s195, 1
        %s199 = scalar_select %p198, %s195, 1
        %s200 = smul.addr %s199, 2
        %s201 = smul.addr %s197, 4
        %s202 = sadd.s32 %s200, %s201
        %s203 = smul.addr %s202, 4
        %s204 = scalar_lea.vmem %s0, %s203
        %s205 = smul.u32 2, %s18
      $region36: #{_lambda_.1} parent=31 // pred_fallthru
        _
    $region32: #{_lambda_.1} parent=5 // pred_fallthru
      _
    %p206 = scmp.le.s32.totalorder 1, %s11
    %p207 = scmp.lt.s32.totalorder %s11, 10
    %p208 = pnand %p206, %p207
    %p209 = pneg %p208
    // Predicated region
    $region37: #{_lambda_.1} parent=5 // pred_check
      _
    $region38: #{_lambda_.1} parent=5 // pred_check_branch
      %211 = sbr.rel (%p208) target = $region40
    $region39: #{_lambda_.1} parent=5 // pred_region
      %s212 = ssub.s32 %s11, 1
      %s213 = smul.u32 2, %s20
      %p214 = scmp.lt.s32.totalorder %s21, 8
      %s215 = scalar_select %p214, %s21, 8
      %p216 = scmp.lt.s32.totalorder %s213, 1
      %s217 = scalar_select %p216, %s213, 1
      %s218 = smul.addr %s217, 2
      %s219 = smul.addr %s215, 4
      %s220 = sadd.s32 %s218, %s219
      %s221 = smul.addr %s220, 4
      %s222 = scalar_lea.vmem %s0, %s221
      %p223 = pneg %p51
      %p224 = pneg %p48
      %p225 = pneg %p72
      %p226 = pneg %p69
      %p227 = pneg %p93
      %p228 = pneg %p90
      %p229 = pneg %p114
      %p230 = pneg %p111
      %p231 = pneg %p135
      %p232 = pneg %p132
      %p233 = pneg %p161
      %p234 = pneg %p158
      %s235 = smul.u32 2, %s20
      %p236 = scmp.lt.s32.totalorder %s235, 1
      %s237 = scalar_select %p236, %s235, 1
      %s238 = smul.addr %s237, 4
      %s239 = smul.addr %s238, 8
      %s240 = scalar_lea.vmem %s5, %s239
      %s241 = smul.u32 2, %s20
      %p242 = scmp.lt.s32.totalorder %s21, 8
      %s243 = scalar_select %p242, %s21, 8
      %p244 = scmp.lt.s32.totalorder %s241, 1
      %s245 = scalar_select %p244, %s241, 1
      %s246 = smul.addr %s245, 2
      %s247 = smul.addr %s243, 4
      %s248 = sadd.s32 %s246, %s247
      %s249 = smul.addr %s248, 4
      %s250 = scalar_lea.vmem %s0, %s249
      %s251 = smul.u32 2, %s20
      %s252 = smul.u32 2, %s20
      %p253 = scmp.lt.s32.totalorder %s252, 1
      %s254 = scalar_select %p253, %s252, 1
      %s255 = smul.addr %s254, 4
      %s256 = smul.addr %s255, 8
      %s257 = scalar_lea.vmem %s5, %s256
      %s258 = smul.u32 2, %s20
      %v260 = vld [vmem:[%s250] sm:$0xff]
      %v261 = vld [vmem:[%s250 + $0x8] sm:$0xff]
      %v262 = vld [vmem:[%s1] sm:$0xf]
      %v263 = vld [vmem:[%s1 + $0x4] sm:$0xf]
      %v264 = vld [vmem:[%s1 + $0x8] sm:$0xf]
      %v265 = vld [vmem:[%s1 + $0xc] sm:$0xf]
      %v266 = vld [vmem:[%s1 + $0x10] sm:$0xf]
      %v267 = vld [vmem:[%s1 + $0x14] sm:$0xf]
      %v268 = vld [vmem:[%s1 + $0x18] sm:$0xf]
      %v269 = vld [vmem:[%s1 + $0x1c] sm:$0xf]
      %v270 = vld [vmem:[%s1 + $0x20] sm:$0xf]
      %v271 = vld [vmem:[%s1 + $0x24] sm:$0xf]
      %v272 = vld [vmem:[%s1 + $0x28] sm:$0xf]
      %v273 = vld [vmem:[%s1 + $0x2c] sm:$0xf]
      %v274 = vld [vmem:[%s1 + $0x30] sm:$0xf]
      %v275 = vld [vmem:[%s1 + $0x34] sm:$0xf]
      %v276 = vld [vmem:[%s1 + $0x38] sm:$0xf]
      %v277 = vld [vmem:[%s1 + $0x3c] sm:$0xf]
      %v278 = vld [vmem:[%s1 + $0x40] sm:$0xf]
      %v279 = vld [vmem:[%s1 + $0x44] sm:$0xf]
      %v280 = vld [vmem:[%s1 + $0x48] sm:$0x3]
      %v281 = vld [vmem:[%s2] sm:$0x1]
      %v283 = vlaneseq
      %v284 = vshrl.u32 %v283, 7
      %v285 = vsub.s32 0, %v284
      %v286 = vrot.slane %v281, %v285
      %v290 = vunpack.c.l.b16 %v260
      %v291 = vunpack.c.h.b16 %v260
      %v292 = vunpack.c.l.b16 %v261
      %v293 = vunpack.c.h.b16 %v261
      %v294 = vpack.c.b16 %v292, %v290
      %v295 = vpack.c.b16 %v293, %v291
      %v316 = vunpack.c.l.b16 %v262
      %v317 = vunpack.c.l.b16 %v263
      %v318 = vunpack.c.l.b16 %v264
      %v319 = vunpack.c.l.b16 %v265
      %v320 = vunpack.c.l.b16 %v266
      %v321 = vunpack.c.l.b16 %v267
      %v322 = vunpack.c.l.b16 %v268
      %v323 = vunpack.c.l.b16 %v269
      %v324 = vunpack.c.l.b16 %v270
      %v325 = vunpack.c.l.b16 %v271
      %v326 = vunpack.c.l.b16 %v272
      %v327 = vunpack.c.l.b16 %v273
      %v328 = vunpack.c.l.b16 %v274
      %v329 = vunpack.c.l.b16 %v275
      %v330 = vunpack.c.l.b16 %v276
      %v331 = vunpack.c.l.b16 %v277
      %v332 = vunpack.c.l.b16 %v278
      %v333 = vunpack.c.l.b16 %v279
      %v334 = vunpack.c.l.b16 %v280
      %v335 = vpack.c.b16 %v317, %v316
      %v336 = vpack.c.b16 %v319, %v318
      %v337 = vpack.c.b16 %v321, %v320
      %v338 = vpack.c.b16 %v323, %v322
      %v339 = vpack.c.b16 %v325, %v324
      %v340 = vpack.c.b16 %v327, %v326
      %v341 = vpack.c.b16 %v329, %v328
      %v342 = vpack.c.b16 %v331, %v330
      %v343 = vpack.c.b16 %v333, %v332
      %v344 = vpack.c.b16 %v334, %v334
      %vm354 = vcmask 154624
      %v356 = vsel %vm354, %v295, 0
      %vm358 = vcmask 1040384
      %vm359 = vcmask 1041408
      %v360 = vsel %vm358, 4294967295, 65535
      %v361 = vsel %vm359, %v360, 0
      %v363 = vand.u32 %v344, %v361
      %365 = vmatprep.subr.bf16.mxu0 0
      %366 = vmatpush1.bf16.msra.mxu0 %v335
      %367 = vmatprep.subr.bf16.mxu0 0
      %368 = vmatpush1.bf16.msra.mxu0 %v336
      %369 = vmatprep.subr.bf16.mxu0 0
      %370 = vmatpush1.bf16.msra.mxu0 %v337
      %371 = vmatprep.subr.bf16.mxu0 0
      %372 = vmatpush1.bf16.msra.mxu0 %v338
      %373 = vmatprep.subr.bf16.mxu0 0
      %374 = vmatpush1.bf16.msra.mxu0 %v339
      %375 = vmatprep.subr.bf16.mxu0 0
      %376 = vmatpush1.bf16.msra.mxu0 %v340
      %377 = vmatprep.subr.bf16.mxu0 0
      %378 = vmatpush1.bf16.msra.mxu0 %v341
      %379 = vmatprep.subr.bf16.mxu0 0
      %380 = vmatpush1.bf16.msra.mxu0 %v342
      %381 = vmatprep.subr.bf16.mxu0 0
      %382 = vmatpush1.bf16.msra.mxu0 %v343
      %383 = vmatprep.subr.bf16.mxu0 0
      %384 = vmatpush1.bf16.msra.mxu0 %v363
      %385 = vmatprep.subr.bf16.mxu0 0
      %386 = vmatpush1.bf16.msra.mxu0 0
      %387 = vmatprep.subr.bf16.mxu0 0
      %388 = vmatpush1.bf16.msra.mxu0 0
      %389 = vmatprep.subr.bf16.mxu0 0
      %390 = vmatpush1.bf16.msra.mxu0 0
      %391 = vmatprep.subr.bf16.mxu0 0
      %392 = vmatpush1.bf16.msra.mxu0 0
      %393 = vmatprep.subr.bf16.mxu0 0
      %394 = vmatpush1.bf16.msra.mxu0 0
      %395 = vmatprep.subr.bf16.mxu0 0
      %396 = vmatpush1.bf16.msra.mxu0 0
      %397 = vmatprep.mubr.bf16.mxu0 %v356
      %398 = vmatmul.mubr.bf16.gmra.mrb[0].mxu0 %v294
      %v399 = vpop.f32.mrb[0].mxu0
      %v400 = vadd.f32 %v286, %v399
      %v401 = vpop.f32.mrb[0].mxu0
      %v402 = vpop.f32.mrb[0].mxu0
      %v403 = vadd.f32 %v286, %v402
      %v404 = vpop.f32.mrb[0].mxu0
      %405 = vdwg.mxu0
      %v406 = vmax.f32 %v400, 0.0
      %v407 = vmax.f32 %v403, 0.0
      %p408 = scmp.eq.s32.totalorder %s21, 0
      // Predicated region
      $region41: #{_lambda_.1} parent=39 // pred_check
        %p409 = pneg %p408
      $region42: #{_lambda_.1} parent=39 // pred_check_branch
        %411 = sbr.rel (%p409) target = $region44
      $region43: #{_lambda_.1} parent=39 // pred_region
        %412 = vst [vmem:[#allocation2] sm:$0xff] 0.0
        %413 = vst [vmem:[#allocation2 + $0x8] sm:$0xff] 0.0
      $region44: #{_lambda_.1} parent=39 // pred_fallthru
        _
      %v414 = vld [vmem:[#allocation2] sm:$0xff]
      %v415 = vld [vmem:[#allocation2 + $0x8] sm:$0xff]
      %v416 = vmax.f32 %v414, %v406
      %v417 = vmax.f32 %v415, %v407
      %418 = vst [vmem:[#allocation2] sm:$0xff] %v416
      %419 = vst [vmem:[#allocation2 + $0x8] sm:$0xff] %v417
      %p420 = scmp.eq.s32.totalorder %s21, 8
      // Predicated region
      $region45: #{_lambda_.1} parent=39 // pred_check
        %p421 = pneg %p420
      $region46: #{_lambda_.1} parent=39 // pred_check_branch
        %423 = sbr.rel (%p421) target = $region48
      $region47: #{_lambda_.1} parent=39 // pred_region
        %v424 = vld [vmem:[#allocation2] sm:$0xff]
        %v425 = vld [vmem:[#allocation2 + $0x8] sm:$0xff]
        %v426 = vpack.c.bf16 %v425, %v424
        %v427 = vld [vmem:[%s3] sm:$0xff]
        %v428 = vld [vmem:[%s3 + $0x8] sm:$0xff]
        %v429 = vld [vmem:[%s3 + $0x10] sm:$0xff]
        %v430 = vld [vmem:[%s3 + $0x18] sm:$0xff]
        %v431 = vld [vmem:[%s3 + $0x20] sm:$0xff]
        %v432 = vld [vmem:[%s3 + $0x28] sm:$0xff]
        %v433 = vld [vmem:[%s3 + $0x30] sm:$0xff]
        %v434 = vld [vmem:[%s3 + $0x38] sm:$0xff]
        %v435 = vld [vmem:[%s3 + $0x40] sm:$0xff]
        %v436 = vld [vmem:[%s3 + $0x48] sm:$0xff]
        %v437 = vld [vmem:[%s3 + $0x50] sm:$0xff]
        %v438 = vld [vmem:[%s3 + $0x58] sm:$0xff]
        %v439 = vld [vmem:[%s3 + $0x60] sm:$0xff]
        %v440 = vld [vmem:[%s3 + $0x68] sm:$0xff]
        %v441 = vld [vmem:[%s3 + $0x70] sm:$0xff]
        %v442 = vld [vmem:[%s3 + $0x78] sm:$0xff]
        %v443 = vld [vmem:[%s3 + $0x80] sm:$0xff]
        %v444 = vld [vmem:[%s3 + $0x88] sm:$0xff]
        %v445 = vld [vmem:[%s3 + $0x90] sm:$0xff]
        %v446 = vld [vmem:[%s3 + $0x98] sm:$0xff]
        %v447 = vld [vmem:[%s3 + $0xa0] sm:$0xff]
        %v448 = vld [vmem:[%s3 + $0xa8] sm:$0xff]
        %v449 = vld [vmem:[%s3 + $0xb0] sm:$0xff]
        %v450 = vld [vmem:[%s3 + $0xb8] sm:$0xff]
        %v451 = vld [vmem:[%s3 + $0xc0] sm:$0xff]
        %v452 = vld [vmem:[%s3 + $0xc8] sm:$0xff]
        %v453 = vld [vmem:[%s3 + $0xd0] sm:$0xff]
        %v454 = vld [vmem:[%s3 + $0xd8] sm:$0xff]
        %v455 = vld [vmem:[%s3 + $0xe0] sm:$0xff]
        %v456 = vld [vmem:[%s3 + $0xe8] sm:$0xff]
        %v457 = vld [vmem:[%s3 + $0xf0] sm:$0xff]
        %v458 = vld [vmem:[%s3 + $0xf8] sm:$0xff]
        %v459 = vld [vmem:[%s4] sm:$0xf]
        %v461 = vlaneseq
        %v462 = vshrl.u32 %v461, 7
        %v463 = vsub.s32 0, %v462
        %v464 = vrot.slane %v459, %v463
        %v465 = vlaneseq
        %v466 = vshrl.u32 %v465, 7
        %v467 = vsub.s32 1, %v466
        %v468 = vrot.slane %v459, %v467
        %v469 = vlaneseq
        %v470 = vshrl.u32 %v469, 7
        %v471 = vsub.s32 2, %v470
        %v472 = vrot.slane %v459, %v471
        %v473 = vlaneseq
        %v474 = vshrl.u32 %v473, 7
        %v475 = vsub.s32 3, %v474
        %v476 = vrot.slane %v459, %v475
        %v513 = vunpack.c.l.b16 %v427
        %v514 = vunpack.c.h.b16 %v427
        %v515 = vunpack.c.l.b16 %v428
        %v516 = vunpack.c.h.b16 %v428
        %v517 = vunpack.c.l.b16 %v429
        %v518 = vunpack.c.h.b16 %v429
        %v519 = vunpack.c.l.b16 %v430
        %v520 = vunpack.c.h.b16 %v430
        %v521 = vunpack.c.l.b16 %v431
        %v522 = vunpack.c.h.b16 %v431
        %v523 = vunpack.c.l.b16 %v432
        %v524 = vunpack.c.h.b16 %v432
        %v525 = vunpack.c.l.b16 %v433
        %v526 = vunpack.c.h.b16 %v433
        %v527 = vunpack.c.l.b16 %v434
        %v528 = vunpack.c.h.b16 %v434
        %v529 = vunpack.c.l.b16 %v435
        %v530 = vunpack.c.h.b16 %v435
        %v531 = vunpack.c.l.b16 %v436
        %v532 = vunpack.c.h.b16 %v436
        %v533 = vunpack.c.l.b16 %v437
        %v534 = vunpack.c.h.b16 %v437
        %v535 = vunpack.c.l.b16 %v438
        %v536 = vunpack.c.h.b16 %v438
        %v537 = vunpack.c.l.b16 %v439
        %v538 = vunpack.c.h.b16 %v439
        %v539 = vunpack.c.l.b16 %v440
        %v540 = vunpack.c.h.b16 %v440
        %v541 = vunpack.c.l.b16 %v441
        %v542 = vunpack.c.h.b16 %v441
        %v543 = vunpack.c.l.b16 %v442
        %v544 = vunpack.c.h.b16 %v442
        %v545 = vunpack.c.l.b16 %v443
        %v546 = vunpack.c.h.b16 %v443
        %v547 = vunpack.c.l.b16 %v444
        %v548 = vunpack.c.h.b16 %v444
        %v549 = vunpack.c.l.b16 %v445
        %v550 = vunpack.c.h.b16 %v445
        %v551 = vunpack.c.l.b16 %v446
        %v552 = vunpack.c.h.b16 %v446
        %v553 = vunpack.c.l.b16 %v447
        %v554 = vunpack.c.h.b16 %v447
        %v555 = vunpack.c.l.b16 %v448
        %v556 = vunpack.c.h.b16 %v448
        %v557 = vunpack.c.l.b16 %v449
        %v558 = vunpack.c.h.b16 %v449
        %v559 = vunpack.c.l.b16 %v450
        %v560 = vunpack.c.h.b16 %v450
        %v561 = vunpack.c.l.b16 %v451
        %v562 = vunpack.c.h.b16 %v451
        %v563 = vunpack.c.l.b16 %v452
        %v564 = vunpack.c.h.b16 %v452
        %v565 = vunpack.c.l.b16 %v453
        %v566 = vunpack.c.h.b16 %v453
        %v567 = vunpack.c.l.b16 %v454
        %v568 = vunpack.c.h.b16 %v454
        %v569 = vunpack.c.l.b16 %v455
        %v570 = vunpack.c.h.b16 %v455
        %v571 = vunpack.c.l.b16 %v456
        %v572 = vunpack.c.h.b16 %v456
        %v573 = vunpack.c.l.b16 %v457
        %v574 = vunpack.c.h.b16 %v457
        %v575 = vunpack.c.l.b16 %v458
        %v576 = vunpack.c.h.b16 %v458
        %v577 = vpack.c.b16 %v517, %v513
        %v578 = vpack.c.b16 %v518, %v514
        %v579 = vpack.c.b16 %v519, %v515
        %v580 = vpack.c.b16 %v520, %v516
        %v581 = vpack.c.b16 %v525, %v521
        %v582 = vpack.c.b16 %v526, %v522
        %v583 = vpack.c.b16 %v527, %v523
        %v584 = vpack.c.b16 %v528, %v524
        %v585 = vpack.c.b16 %v533, %v529
        %v586 = vpack.c.b16 %v534, %v530
        %v587 = vpack.c.b16 %v535, %v531
        %v588 = vpack.c.b16 %v536, %v532
        %v589 = vpack.c.b16 %v541, %v537
        %v590 = vpack.c.b16 %v542, %v538
        %v591 = vpack.c.b16 %v543, %v539
        %v592 = vpack.c.b16 %v544, %v540
        %v593 = vpack.c.b16 %v549, %v545
        %v594 = vpack.c.b16 %v550, %v546
        %v595 = vpack.c.b16 %v551, %v547
        %v596 = vpack.c.b16 %v552, %v548
        %v597 = vpack.c.b16 %v557, %v553
        %v598 = vpack.c.b16 %v558, %v554
        %v599 = vpack.c.b16 %v559, %v555
        %v600 = vpack.c.b16 %v560, %v556
        %v601 = vpack.c.b16 %v565, %v561
        %v602 = vpack.c.b16 %v566, %v562
        %v603 = vpack.c.b16 %v567, %v563
        %v604 = vpack.c.b16 %v568, %v564
        %v605 = vpack.c.b16 %v573, %v569
        %v606 = vpack.c.b16 %v574, %v570
        %v607 = vpack.c.b16 %v575, %v571
        %v608 = vpack.c.b16 %v576, %v572
        %641 = vmatprep.subr.bf16.mxu0 %v578
        %642 = vmatpush1.bf16.msra.mxu0 %v577
        %643 = vmatprep.subr.bf16.mxu0 %v582
        %644 = vmatpush1.bf16.msra.mxu0 %v581
        %645 = vmatprep.subr.bf16.mxu0 %v586
        %646 = vmatpush1.bf16.msra.mxu0 %v585
        %647 = vmatprep.subr.bf16.mxu0 %v590
        %648 = vmatpush1.bf16.msra.mxu0 %v589
        %649 = vmatprep.subr.bf16.mxu0 %v594
        %650 = vmatpush1.bf16.msra.mxu0 %v593
        %651 = vmatprep.subr.bf16.mxu0 %v598
        %652 = vmatpush1.bf16.msra.mxu0 %v597
        %653 = vmatprep.subr.bf16.mxu0 %v602
        %654 = vmatpush1.bf16.msra.mxu0 %v601
        %655 = vmatprep.subr.bf16.mxu0 %v606
        %656 = vmatpush1.bf16.msra.mxu0 %v605
        %657 = vmatprep.subr.bf16.mxu0 0
        %658 = vmatpush1.bf16.msra.mxu0 0
        %659 = vmatprep.subr.bf16.mxu0 0
        %660 = vmatpush1.bf16.msra.mxu0 0
        %661 = vmatprep.subr.bf16.mxu0 0
        %662 = vmatpush1.bf16.msra.mxu0 0
        %663 = vmatprep.subr.bf16.mxu0 0
        %664 = vmatpush1.bf16.msra.mxu0 0
        %665 = vmatprep.subr.bf16.mxu0 0
        %666 = vmatpush1.bf16.msra.mxu0 0
        %667 = vmatprep.subr.bf16.mxu0 0
        %668 = vmatpush1.bf16.msra.mxu0 0
        %669 = vmatprep.subr.bf16.mxu0 0
        %670 = vmatpush1.bf16.msra.mxu0 0
        %671 = vmatprep.subr.bf16.mxu0 0
        %672 = vmatpush1.bf16.msra.mxu0 0
        %673 = vmatprep.mubr.bf16.mxu0 0
        %674 = vmatmul.mubr.bf16.gmra.mrb[0].mxu0 %v426
        %v675 = vpop.f32.mrb[0].mxu0
        %v676 = vadd.f32 %v464, %v675
        %v677 = vpop.f32.mrb[0].mxu0
        %v678 = vadd.f32 %v468, %v677
        %v679 = vpop.f32.mrb[0].mxu0
        %v680 = vadd.f32 %v464, %v679
        %v681 = vpop.f32.mrb[0].mxu0
        %v682 = vadd.f32 %v468, %v681
        %683 = vdwg.mxu0
        %684 = vmatprep.subr.bf16.mxu0 %v580
        %685 = vmatpush1.bf16.msra.mxu0 %v579
        %686 = vmatprep.subr.bf16.mxu0 %v584
        %687 = vmatpush1.bf16.msra.mxu0 %v583
        %688 = vmatprep.subr.bf16.mxu0 %v588
        %689 = vmatpush1.bf16.msra.mxu0 %v587
        %690 = vmatprep.subr.bf16.mxu0 %v592
        %691 = vmatpush1.bf16.msra.mxu0 %v591
        %692 = vmatprep.subr.bf16.mxu0 %v596
        %693 = vmatpush1.bf16.msra.mxu0 %v595
        %694 = vmatprep.subr.bf16.mxu0 %v600
        %695 = vmatpush1.bf16.msra.mxu0 %v599
        %696 = vmatprep.subr.bf16.mxu0 %v604
        %697 = vmatpush1.bf16.msra.mxu0 %v603
        %698 = vmatprep.subr.bf16.mxu0 %v608
        %699 = vmatpush1.bf16.msra.mxu0 %v607
        %700 = vmatprep.subr.bf16.mxu0 0
        %701 = vmatpush1.bf16.msra.mxu0 0
        %702 = vmatprep.subr.bf16.mxu0 0
        %703 = vmatpush1.bf16.msra.mxu0 0
        %704 = vmatprep.subr.bf16.mxu0 0
        %705 = vmatpush1.bf16.msra.mxu0 0
        %706 = vmatprep.subr.bf16.mxu0 0
        %707 = vmatpush1.bf16.msra.mxu0 0
        %708 = vmatprep.subr.bf16.mxu0 0
        %709 = vmatpush1.bf16.msra.mxu0 0
        %710 = vmatprep.subr.bf16.mxu0 0
        %711 = vmatpush1.bf16.msra.mxu0 0
        %712 = vmatprep.subr.bf16.mxu0 0
        %713 = vmatpush1.bf16.msra.mxu0 0
        %714 = vmatprep.subr.bf16.mxu0 0
        %715 = vmatpush1.bf16.msra.mxu0 0
        %716 = vmatprep.mubr.bf16.mxu0 0
        %717 = vmatmul.mubr.bf16.gmra.mrb[0].mxu0 %v426
        %v718 = vpop.f32.mrb[0].mxu0
        %v719 = vadd.f32 %v472, %v718
        %v720 = vpop.f32.mrb[0].mxu0
        %v721 = vadd.f32 %v476, %v720
        %v722 = vpop.f32.mrb[0].mxu0
        %v723 = vadd.f32 %v472, %v722
        %v724 = vpop.f32.mrb[0].mxu0
        %v725 = vadd.f32 %v476, %v724
        %726 = vdwg.mxu0
        %727 = vst [vmem:[%s257] sm:$0xff] %v676
        %728 = vst [vmem:[%s257 + $0x8] sm:$0xff] %v678
        %729 = vst [vmem:[%s257 + $0x10] sm:$0xff] %v719
        %730 = vst [vmem:[%s257 + $0x18] sm:$0xff] %v721
        %731 = vst [vmem:[%s257 + $0x20] sm:$0xff] %v680
        %732 = vst [vmem:[%s257 + $0x28] sm:$0xff] %v682
        %733 = vst [vmem:[%s257 + $0x30] sm:$0xff] %v723
        %734 = vst [vmem:[%s257 + $0x38] sm:$0xff] %v725
      $region48: #{_lambda_.1} parent=39 // pred_fallthru
        _
      %s735 = smul.u32 2, %s20
      %p736 = scmp.lt.s32.totalorder %s735, 1
      %s737 = scalar_select %p736, %s735, 1
      %s738 = smul.addr %s737, 4
      %s739 = smul.addr %s738, 8
      %s740 = scalar_lea.vmem %s5, %s739
      // Predicated region
      $region49: #{_lambda_.1} parent=39 // pred_check
        %p741 = pneg %p158
      $region50: #{_lambda_.1} parent=39 // pred_check_branch
        %743 = sbr.rel (%p741) target = $region52
      $region51: #{_lambda_.1} parent=39 // pred_region
        %s744 = smul.u32 2, %s20
      $region52: #{_lambda_.1} parent=39 // pred_fallthru
        _
      // Predicated region
      $region53: #{_lambda_.1} parent=39 // pred_check
        %p745 = pneg %p158
      $region54: #{_lambda_.1} parent=39 // pred_check_branch
        %747 = sbr.rel (%p745) target = $region56
      $region55: #{_lambda_.1} parent=39 // pred_region
        %s748 = smul.u32 2, %s20
        %p749 = scmp.lt.s32.totalorder %s748, 1
        %s750 = scalar_select %p749, %s748, 1
        %s751 = smul.addr %s750, 4
        %s752 = smul.addr %s751, 8
        %s753 = scalar_lea.vmem %s5, %s752
      $region56: #{_lambda_.1} parent=39 // pred_fallthru
        _
    $region40: #{_lambda_.1} parent=5 // pred_fallthru
      _
    %p754 = scmp.le.s32.totalorder 2, %s11
    // Predicated region
    $region57: #{_lambda_.1} parent=5 // pred_check
      %p755 = pneg %p754
    $region58: #{_lambda_.1} parent=5 // pred_check_branch
      %757 = sbr.rel (%p755) target = $region60
    $region59: #{_lambda_.1} parent=5 // pred_region
      %s758 = ssub.s32 %s11, 2
    $region60: #{_lambda_.1} parent=5 // pred_fallthru
      _
  $region6: #{_lambda_.1} parent=0 // loop_footer
    %s15 = sadd.s32 1, %s11
  $region7: #{_lambda_.1} parent=0 // loop_footer_branch
    %10 = sbr.rel target = $region3
  $region8: #{_lambda_.1} parent=0 // loop_exit
    _

</llo_original>
